<compile_context>
chip_gen: v5e
topology: v5e:2x2
jax: 0.10.0
libtpu: 0.0.40
codegen_flags: <defaults>
</compile_context>

<pallas_src>
import functools

import jax
import jax.numpy as jnp
from jax.experimental import pallas as pl
from jax.experimental.pallas import tpu as pltpu


def _round_up(v, m):
    return ((v + m - 1) // m) * m


def _linear_kernel(x_ref, wt_ref, bias_ref, o_ref):
    # Grid: (i over M tiles, j over N tiles, k over K tiles); k is the reduction.
    # Output block index is constant over k -> o_ref stays resident in VMEM and
    # acts as the f32 accumulator directly (no scratch, no epilogue copy).
    k = pl.program_id(2)

    @pl.when(k == 0)
    def _init():
        # Seed the accumulator with the bias (added exactly once).
        o_ref[...] = jnp.broadcast_to(bias_ref[...], o_ref.shape).astype(o_ref.dtype)

    # Weight arrives already transposed: (tk, tn). MXU matmul, f32 accumulation.
    o_ref[...] += jnp.dot(
        x_ref[...], wt_ref[...], preferred_element_type=jnp.float32
    )


@functools.partial(jax.jit, static_argnames=("out_features", "tm", "tn", "tk"))
def _linear_forward(x, wt_p, bias_p, *, out_features, tm, tn, tk):
    """x:(B, A) f32/bf16, wt_p:(K, N) pre-transposed+padded weight, bias_p:(1, N) f32."""
    B, A = x.shape
    K, N = wt_p.shape
    compute_dtype = wt_p.dtype

    # Clamp M tile to the batch; K/N tiles were fixed at weight-prep time so
    # the padded K/N are guaranteed multiples of tk/tn.
    tm = min(tm, _round_up(B, 8))
    M = _round_up(B, tm)

    tn = min(tn, N)
    tk = min(tk, K)

    # v7x has 2 TensorCores: if there would be only one "parallel" output tile,
    # split the N axis so both cores get work (harmless on v5e/v6e).
    if (M // tm) * (N // tn) == 1 and N % 256 == 0:
        tn = N // 2

    # Pad / cast x only when needed (free for aligned production shapes).
    x_c = x if x.dtype == compute_dtype else x.astype(compute_dtype)
    if (B, A) != (M, K):
        x_p = jnp.zeros((M, K), compute_dtype).at[:B, :A].set(x_c)
    else:
        x_p = x_c

    grid = (M // tm, N // tn, K // tk)

    out_p = pl.pallas_call(
        _linear_kernel,
        out_shape=jax.ShapeDtypeStruct((M, N), jnp.float32),
        grid_spec=pltpu.PrefetchScalarGridSpec(
            num_scalar_prefetch=0,
            grid=grid,
            in_specs=[
                pl.BlockSpec((tm, tk), lambda i, j, k: (i, k)),   # x tile
                pl.BlockSpec((tk, tn), lambda i, j, k: (k, j)),   # W^T tile
                pl.BlockSpec((1, tn), lambda i, j, k: (0, j)),    # bias tile
            ],
            out_specs=pl.BlockSpec((tm, tn), lambda i, j, k: (i, j)),
        ),
        compiler_params=pltpu.CompilerParams(
            dimension_semantics=("parallel", "parallel", "arbitrary"),
            # 48 MiB scoped VMEM: well above the ~12 MiB double-buffered
            # footprint at 1024x1024x512 bf16, with headroom on v7x (64 MiB/TC).
            vmem_limit_bytes=48 * 1024 * 1024,
        ),
    )(x_p, wt_p, bias_p)

    if (M, N) != (B, out_features):
        out_p = out_p[:B, :out_features]
    return out_p


class PallasLinear:
    """y = x @ W^T + b, tiled Pallas TPU matmul.

    Weight is transposed, padded to (8,128)/tile-aligned shape and cast to the
    compute dtype ONCE here (parameter-init time), so none of that layout work
    sits on the per-call hot path.
    """

    def __init__(self, weight, bias, *, tm=1024, tn=1024, tk=512,
                 compute_dtype=jnp.bfloat16):
        out_features, in_features = weight.shape
        self.out_features = int(out_features)
        self.in_features = int(in_features)
        self.compute_dtype = compute_dtype

        # Clamp N/K tiles to the lane-aligned weight dims; tn stays a multiple
        # of 256 where the problem allows (full MXU columns on v6e/v7x).
        self.tn = min(tn, _round_up(self.out_features, 128))
        self.tk = min(tk, _round_up(self.in_features, 128))
        self.tm = tm

        N = _round_up(self.out_features, self.tn)
        K = _round_up(self.in_features, self.tk)

        wt = weight.T.astype(compute_dtype)                     # (A, Bout)
        self.wt_p = (
            jnp.zeros((K, N), compute_dtype)
            .at[: self.in_features, : self.out_features]
            .set(wt)
        )
        self.bias_p = (
            jnp.zeros((1, N), jnp.float32)
            .at[0, : self.out_features]
            .set(bias.astype(jnp.float32))
        )

    def __call__(self, x):
        return _linear_forward(
            x,
            self.wt_p,
            self.bias_p,
            out_features=self.out_features,
            tm=self.tm,
            tn=self.tn,
            tk=self.tk,
        )


if __name__ == "__main__":
    # Small shapes consistent with nn.Linear(a, b): batch=8, a=32, b=16.
    batch, a, b = 8, 32, 16

    key = jax.random.PRNGKey(0)
    kx, kw, kb = jax.random.split(key, 3)

    # Deterministic parameter init mimicking PyTorch's nn.Linear default
    # (uniform in [-1/sqrt(a), 1/sqrt(a)]).
    bound = 1.0 / jnp.sqrt(jnp.float32(a))
    weight = jax.random.uniform(kw, (b, a), jnp.float32, -bound, bound)
    bias = jax.random.uniform(kb, (b,), jnp.float32, -bound, bound)

    x = jax.random.normal(kx, (batch, a), jnp.float32)

    # Pure-JAX reference.
    ref = x @ weight.T + bias

    # Exact-numerics path (f32 operands, matches the PyTorch f32 module).
    lin_f32 = PallasLinear(weight, bias, compute_dtype=jnp.float32)
    out_f32 = jax.block_until_ready(lin_f32(x))
    assert out_f32.shape == (batch, b)
    assert jnp.allclose(out_f32, ref, atol=1e-5, rtol=1e-5)

    # Fast path (default): bf16 operands on the MXU, f32 accumulation.
    lin_bf16 = PallasLinear(weight, bias)
    out_bf16 = jax.block_until_ready(lin_bf16(x))
    assert out_bf16.shape == (batch, b)
    assert jnp.allclose(out_bf16, ref, atol=5e-2, rtol=5e-2)

    print("KERNEL_OK")
</pallas_src>

<mosaic_0001>
module attributes {stable_mosaic.version = 11 : i64} {
  func.func @_linear_kernel(%arg0: i32, %arg1: i32, %arg2: i32, %arg3: memref<8x128xf32, #tpu.memory_space<vmem>>, %arg4: memref<128x128xf32, #tpu.memory_space<vmem>>, %arg5: memref<1x128xf32, #tpu.memory_space<vmem>>, %arg6: memref<8x128xf32, #tpu.memory_space<vmem>>) attributes {dimension_semantics = [#tpu.dimension_semantics<parallel>, #tpu.dimension_semantics<parallel>, #tpu.dimension_semantics<arbitrary>], iteration_bounds = array<i64: 1, 1, 1>, scalar_prefetch = 0 : i64, scratch_operands = 0 : i64, tpu.core_type = #tpu.core_type<tc>, window_params = [{transform_indices = @transform_0, window_bounds = array<i64: 8, 128>}, {transform_indices = @transform_1, window_bounds = array<i64: 128, 128>}, {transform_indices = @transform_2, window_bounds = array<i64: 1, 128>}, {transform_indices = @transform_3, window_bounds = array<i64: 8, 128>}]} {
    %c0_i32 = arith.constant 0 : i32
    %0 = arith.cmpi eq, %arg2, %c0_i32 : i32
    %1 = arith.extui %0 : i1 to i32
    %c0_i32_0 = arith.constant 0 : i32
    %2 = arith.cmpi ne, %1, %c0_i32_0 : i32
    scf.if %2 {
      %c0_8 = arith.constant 0 : index
      %c0_9 = arith.constant 0 : index
      %9 = vector.load %arg5[%c0_8, %c0_9] : memref<1x128xf32, #tpu.memory_space<vmem>>, vector<1x128xf32>
      %10 = vector.shape_cast %9 : vector<1x128xf32> to vector<1x128xf32>
      %11 = vector.broadcast %10 : vector<1x128xf32> to vector<8x128xf32>
      %c0_10 = arith.constant 0 : index
      %c0_11 = arith.constant 0 : index
      %12 = vector.load %arg6[%c0_10, %c0_11] : memref<8x128xf32, #tpu.memory_space<vmem>>, vector<8x128xf32>
      tpu.vector_store %arg6[%c0_10, %c0_11], %11 {strides = array<i32>} : memref<8x128xf32, #tpu.memory_space<vmem>>, vector<8x128xf32>,
    } else {
    }
    %c0 = arith.constant 0 : index
    %c0_1 = arith.constant 0 : index
    %3 = vector.load %arg6[%c0, %c0_1] : memref<8x128xf32, #tpu.memory_space<vmem>>, vector<8x128xf32>
    %c0_2 = arith.constant 0 : index
    %c0_3 = arith.constant 0 : index
    %4 = vector.load %arg3[%c0_2, %c0_3] : memref<8x128xf32, #tpu.memory_space<vmem>>, vector<8x128xf32>
    %c0_4 = arith.constant 0 : index
    %c0_5 = arith.constant 0 : index
    %5 = vector.load %arg4[%c0_4, %c0_5] : memref<128x128xf32, #tpu.memory_space<vmem>>, vector<128x128xf32>
    %cst = arith.constant dense<0.000000e+00> : vector<8x128xf32>
    %6 = tpu.matmul %4, %5, %cst {dimension_numbers = #tpu.dot_dimension_numbers<[1], [0], [0], [1], [0, 0, 1, 1], [], []>} : vector<8x128xf32>, vector<128x128xf32>, vector<8x128xf32> -> vector<8x128xf32>
    %7 = arith.addf %3, %6 : vector<8x128xf32>
    %c0_6 = arith.constant 0 : index
    %c0_7 = arith.constant 0 : index
    %8 = vector.load %arg6[%c0_6, %c0_7] : memref<8x128xf32, #tpu.memory_space<vmem>>, vector<8x128xf32>
    tpu.vector_store %arg6[%c0_6, %c0_7], %7 {strides = array<i32>} : memref<8x128xf32, #tpu.memory_space<vmem>>, vector<8x128xf32>,
    return
  }
  func.func @transform_0(%arg0: i32, %arg1: i32, %arg2: i32) -> (i32, i32) {
    %c0_i32 = arith.constant 0 : i32
    return %arg0, %arg2 : i32, i32
  }
  func.func @transform_1(%arg0: i32, %arg1: i32, %arg2: i32) -> (i32, i32) {
    %c0_i32 = arith.constant 0 : i32
    return %arg2, %arg1 : i32, i32
  }
  func.func @transform_2(%arg0: i32, %arg1: i32, %arg2: i32) -> (i32, i32) {
    %c0_i32 = arith.constant 0 : i32
    %c0_i32_0 = arith.constant 0 : i32
    return %c0_i32, %arg1 : i32, i32
  }
  func.func @transform_3(%arg0: i32, %arg1: i32, %arg2: i32) -> (i32, i32) {
    %c0_i32 = arith.constant 0 : i32
    return %arg0, %arg1 : i32, i32
  }
}

</mosaic_0001>

<llo_original>
// kernel: _linear_forward.1
$region0: #{_linear_forward.1}
  #allocation0 [shape = 'u32[]', space=smem, size = 0x4, offset = 0x4, fixed_abs, tag = 'smem constant byte address 0x4 - core index']
  #allocation1 [shape = 'u32[72,128]{1,0:T(1,128)}', space=vmem, size = 0x9000, scoped, tag = 'internal scratch']
  %s0 = inlined_call_operand.vmem [shape: f32[8,128], index: 0, kind: input, shape index: {}]
  %s1 = inlined_call_operand.hbm [shape: f32[128,128], index: 1, kind: input, shape index: {}]
  %s2 = inlined_call_operand.vmem [shape: f32[1,128], index: 2, kind: input, shape index: {}]
  %s3 = inlined_call_operand.hbm [shape: f32[8,128], index: 3, kind: output, shape index: {}]
  %s4 = sld [smem:[#allocation0]]
  $region30: #{_linear_forward.1} parent=0
    _
  %s6 = ssub.s32 1, %s4
  %s7 = scalar_select 0, %s6, %s4
  $region1: #{_linear_forward.1} parent=0
    #allocation2 [shape = 'u8[65536]{0}', space=vmem, size = 0x10000, scoped, tag = 'input window, operand 1, single buffered']
    #allocation3 [shape = 's32[1]{0}', space=sflag, size = 0x4, scoped, tag = 'scoped memory for _linear_forward.1']
    #allocation4 [shape = 's32[1]{0}', space=sflag, size = 0x4, scoped, tag = 'scoped memory for _linear_forward.1']
    #allocation5 [shape = 'u8[4096]{0}', space=vmem, size = 0x1000, scoped, tag = 'output window, operand 0, single buffered']
    %8 = vsyncpa [#allocation3], 0
    %9 = vsyncpa [#allocation4], 0
    // Predicated region
    $region2: #{_linear_forward.1} parent=1 // pred_check
      _
    $region3: #{_linear_forward.1} parent=1 // pred_check_branch
      %11 = sbr.rel (0) target = $region5
    $region4: #{_linear_forward.1} parent=1 // pred_region
      _
    $region5: #{_linear_forward.1} parent=1 // pred_fallthru
      _
    // Predicated region
    $region6: #{_linear_forward.1} parent=1 // pred_check
      _
    $region7: #{_linear_forward.1} parent=1 // pred_check_branch
      %13 = sbr.rel (0) target = $region9
    $region8: #{_linear_forward.1} parent=1 // pred_region
      %15 = vsyncadd [#allocation3], 0
      %s16 = sshll.u32 %s1, 4
      %s17 = int_to_ptr.hbm [resolvable:$true] %s16
      %s18 = sshll.u32 [#allocation2], 4
      %s19 = int_to_ptr.vmem [resolvable:$true] %s18
      %24 = dma.hbm_to_vmem [thread:$0]  %s17, 2048, %s19, [#allocation3], 128, 128, 8
    $region9: #{_linear_forward.1} parent=1 // pred_fallthru
      _
    // Predicated region
    $region10: #{_linear_forward.1} parent=1 // pred_check
      _
    $region11: #{_linear_forward.1} parent=1 // pred_check_branch
      %26 = sbr.rel (0) target = $region13
    $region12: #{_linear_forward.1} parent=1 // pred_region
      _
    $region13: #{_linear_forward.1} parent=1 // pred_fallthru
      _
    // Predicated region
    $region14: #{_linear_forward.1} parent=1 // pred_check
      _
    $region15: #{_linear_forward.1} parent=1 // pred_check_branch
      %28 = sbr.rel (0) target = $region17
    $region16: #{_linear_forward.1} parent=1 // pred_region
      %30 = dma.done [#allocation3], 2048
    $region17: #{_linear_forward.1} parent=1 // pred_fallthru
      _
    %p31 = scmp.eq.s32.totalorder 0, 0
    // Predicated region
    $region18: #{_linear_forward.1} parent=1 // pred_check
      %p32 = pneg %p31
    $region19: #{_linear_forward.1} parent=1 // pred_check_branch
      %34 = sbr.rel (%p32) target = $region21
    $region20: #{_linear_forward.1} parent=1 // pred_region
      %v35 = vld [vmem:[%s2] sm:$0x1]
      %v37 = vperm.slane %v35, 0
      %39 = vst [vmem:[#allocation5] sm:$0xff] %v37
    $region21: #{_linear_forward.1} parent=1 // pred_fallthru
      _
    %v40 = vld [vmem:[#allocation5] sm:$0xff]
    %v41 = vld [vmem:[%s0] sm:$0xff]
    %v42 = vld [vmem:[#allocation2] sm:$0xff]
    %v43 = vld [vmem:[#allocation2 + $0x8] sm:$0xff]
    %v44 = vld [vmem:[#allocation2 + $0x10] sm:$0xff]
    %v45 = vld [vmem:[#allocation2 + $0x18] sm:$0xff]
    %v46 = vld [vmem:[#allocation2 + $0x20] sm:$0xff]
    %v47 = vld [vmem:[#allocation2 + $0x28] sm:$0xff]
    %v48 = vld [vmem:[#allocation2 + $0x30] sm:$0xff]
    %v49 = vld [vmem:[#allocation2 + $0x38] sm:$0xff]
    %v50 = vld [vmem:[#allocation2 + $0x40] sm:$0xff]
    %v51 = vld [vmem:[#allocation2 + $0x48] sm:$0xff]
    %v52 = vld [vmem:[#allocation2 + $0x50] sm:$0xff]
    %v53 = vld [vmem:[#allocation2 + $0x58] sm:$0xff]
    %v54 = vld [vmem:[#allocation2 + $0x60] sm:$0xff]
    %v55 = vld [vmem:[#allocation2 + $0x68] sm:$0xff]
    %v56 = vld [vmem:[#allocation2 + $0x70] sm:$0xff]
    %v57 = vld [vmem:[#allocation2 + $0x78] sm:$0xff]
    %58 = vmatpush.msra.mxu0 %v57
    %59 = vmatpush.msra.mxu0 %v56
    %60 = vmatpush.msra.mxu0 %v55
    %61 = vmatpush.msra.mxu0 %v54
    %62 = vmatpush.msra.mxu0 %v53
    %63 = vmatpush.msra.mxu0 %v52
    %64 = vmatpush.msra.mxu0 %v51
    %65 = vmatpush.msra.mxu0 %v50
    %66 = vmatpush.msra.mxu0 %v49
    %67 = vmatpush.msra.mxu0 %v48
    %68 = vmatpush.msra.mxu0 %v47
    %69 = vmatpush.msra.mxu0 %v46
    %70 = vmatpush.msra.mxu0 %v45
    %71 = vmatpush.msra.mxu0 %v44
    %72 = vmatpush.msra.mxu0 %v43
    %73 = vmatpush.msra.mxu0 %v42
    %74 = vmatmul.f32.gmra.mxu0 %v41
    %v75 = vpop.f32.mrf.mxu0
    %v76 = vadd.f32 0.0, %v75
    %77 = vdwg.mxu0
    %v78 = vadd.f32 %v40, %v76
    %79 = vst [vmem:[#allocation5] sm:$0xff] %v78
    // Predicated region
    $region22: #{_linear_forward.1} parent=1 // pred_check
      _
    $region23: #{_linear_forward.1} parent=1 // pred_check_branch
      %81 = sbr.rel (0) target = $region25
    $region24: #{_linear_forward.1} parent=1 // pred_region
      %83 = vsyncadd [#allocation4], 0
      %s85 = sshll.u32 [#allocation5], 4
      %s86 = int_to_ptr.vmem [resolvable:$true] %s85
      %s87 = sshll.u32 %s3, 4
      %s88 = int_to_ptr.hbm [resolvable:$true] %s87
      %90 = dma.vmem_to_hbm [thread:$0]  %s86, 128, %s88, [#allocation4]
    $region25: #{_linear_forward.1} parent=1 // pred_fallthru
      _
    // Predicated region
    $region26: #{_linear_forward.1} parent=1 // pred_check
      _
    $region27: #{_linear_forward.1} parent=1 // pred_check_branch
      %92 = sbr.rel (0) target = $region29
    $region28: #{_linear_forward.1} parent=1 // pred_region
      %94 = dma.done [#allocation4], 128
    $region29: #{_linear_forward.1} parent=1 // pred_fallthru
      _
    %95 = vsyncpa [#allocation3], 1
    %96 = vsyncpa [#allocation4], 1

</llo_original>
